<compile_context>
chip_gen: v7x
topology: tpu7x:2x2x1
jax: 0.10.0
libtpu: 0.0.40
codegen_flags: <defaults>
</compile_context>

<pallas_src>
import jax
import jax.numpy as jnp
from jax.experimental import pallas as pl
from jax.experimental.pallas import tpu as pltpu


def _bias_svd_kernel(a_ref,      # (Dp, TB) f32: gathered user embedding rows (feature-major)
                     b_ref,      # (Dp, TB) f32: gathered item embedding rows (feature-major)
                     bias_ref,   # (1, TB)  f32: user_bias + item_bias + global_bias
                     out_ref):   # (1, TB)  f32: lane-dense output tile
    prod = a_ref[...] * b_ref[...]                        # VPU elementwise, (Dp, TB)
    dot = jnp.sum(prod, axis=0, keepdims=True)            # XLU sublane reduce -> (1, TB)
    out_ref[...] = dot + bias_ref[...]                    # epilogue bias add


def _vmem_capacity_bytes(default=64 << 20):
    """Generation-aware VMEM capacity (falls back to the smallest, v7x's 64 MiB)."""
    try:
        info = pltpu.get_tpu_info()
        cap = getattr(info, "vmem_capacity_bytes", None)
        if cap:
            return int(cap)
    except Exception:
        pass
    return default


def bias_svd_forward(user_ids, item_ids, user_emb, item_emb, user_bias, item_bias,
                     global_bias, *, max_tb=4096):
    """Pallas implementation of BiasSVDNet.forward.

    Args:
      user_ids:    (B,) int32
      item_ids:    (B,) int32
      user_emb:    (num_users, D) float32
      item_emb:    (num_items, D) float32
      user_bias:   (num_users, 1) float32
      item_bias:   (num_items, 1) float32
      global_bias: (1,) float32
    Returns:
      (B,) float32 predictions.
    """
    B = user_ids.shape[0]
    D = user_emb.shape[1]

    # Feature rows padded only to the sublane multiple (no folded bias rows).
    Dp = 8 * pl.cdiv(D, 8)

    # --- Batch tile selection ---------------------------------------------
    b_pad128 = 128 * pl.cdiv(B, 128)

    # VMEM budget: 2 slab tiles + bias row + out row, double buffered.
    vmem_cap = _vmem_capacity_bytes()
    vmem_budget = min(vmem_cap // 2, 48 << 20)
    tb_budget = vmem_budget // (8 * (2 * Dp + 2))          # bytes per TB of working set
    tb_budget = max(128, (tb_budget // 128) * 128)

    max_tb_r = max(128, (max_tb // 128) * 128)
    TB = max(128, min(tb_budget, max_tb_r, b_pad128))

    # Large single-tile batches: split into >=2 tiles so v7x can use both TCs.
    if TB >= b_pad128 and b_pad128 >= 2048:
        TB = max(128, ((b_pad128 // 2) // 128) * 128)

    # Guard against tail-padding waste (> ~25% padded pairs).
    while TB > 128 and (TB * pl.cdiv(B, TB) - B) * 4 > TB * pl.cdiv(B, TB):
        TB = max(128, ((TB // 2) // 128) * 128)

    B_pad = TB * pl.cdiv(B, TB)

    # Explicit scoped-VMEM limit (v5e default is only 16 MiB).
    working_set = 2 * (2 * Dp + 2) * TB * 4
    vmem_limit = int(min(vmem_cap * 7 // 8, max(32 << 20, 2 * working_set)))

    # --- Wrapper-side gather (XLA) -----------------------------------------
    # Pad ids to the tile boundary (index 0 is valid; padded outputs are dropped).
    uid = jnp.pad(user_ids.astype(jnp.int32), (0, B_pad - B))
    iid = jnp.pad(item_ids.astype(jnp.int32), (0, B_pad - B))

    # Feature-major layout: batch on lanes, features on sublanes.
    ue = jnp.take(user_emb.astype(jnp.float32), uid, axis=0).T   # (D, B_pad)
    ie = jnp.take(item_emb.astype(jnp.float32), iid, axis=0).T   # (D, B_pad)
    ub = jnp.take(user_bias.astype(jnp.float32), uid, axis=0).T  # (1, B_pad)
    ib = jnp.take(item_bias.astype(jnp.float32), iid, axis=0).T  # (1, B_pad)
    gb = jnp.reshape(global_bias, (1, 1)).astype(jnp.float32)

    if Dp > D:
        fpad = jnp.zeros((Dp - D, B_pad), jnp.float32)
        a_slab = jnp.concatenate([ue, fpad], axis=0)             # (Dp, B_pad)
        b_slab = jnp.concatenate([ie, fpad], axis=0)             # (Dp, B_pad)
    else:
        a_slab, b_slab = ue, ie                                  # (Dp, B_pad)

    # All three bias contributions folded into one lane-dense row.
    bias_sum = ub + ib + gb                                      # (1, B_pad)

    grid = (B_pad // TB,)

    # TODO(synk): on v7x, pltpu.CORE_PARALLEL on the batch axis (or an explicit
    # tensorcore-mesh core_map) would shard tiles across both TensorCores.
    out = pl.pallas_call(
        _bias_svd_kernel,
        out_shape=jax.ShapeDtypeStruct((1, B_pad), jnp.float32),
        grid_spec=pltpu.PrefetchScalarGridSpec(
            num_scalar_prefetch=0,
            grid=grid,
            in_specs=[
                pl.BlockSpec((Dp, TB), lambda t: (0, t)),   # user-side slab tile
                pl.BlockSpec((Dp, TB), lambda t: (0, t)),   # item-side slab tile
                pl.BlockSpec((1, TB), lambda t: (0, t)),    # summed bias row tile
            ],
            out_specs=pl.BlockSpec((1, TB), lambda t: (0, t)),   # lane-dense output
        ),
        compiler_params=pltpu.CompilerParams(
            dimension_semantics=("parallel",),              # independent batch tiles
            vmem_limit_bytes=vmem_limit,
            # Let XLA fuse the gather/transpose/pad producers into the kernel
            # instead of materializing the slabs in HBM first.
            allow_input_fusion=[True, True, True],
        ),
    )(a_slab, b_slab, bias_sum)

    return out[0, :B]


def bias_svd_reference(user_ids, item_ids, user_emb, item_emb, user_bias, item_bias,
                       global_bias):
    """Pure-JAX reference mirroring the PyTorch forward."""
    ue = user_emb[user_ids]                        # (B, D)
    ie = item_emb[item_ids]                        # (B, D)
    ub = user_bias[user_ids, 0]                    # (B,)
    ib = item_bias[item_ids, 0]                    # (B,)
    dot = jnp.sum(ue * ie, axis=1)                 # (B,)
    return jnp.reshape(global_bias, ())[...] + ub + ib + dot


if __name__ == "__main__":
    # Small deterministic setup consistent with the module (latent_factors=32 here).
    num_users = 64
    num_items = 64
    latent_factors = 32
    batch = 8

    key = jax.random.PRNGKey(0)
    k_ue, k_ie, k_ub, k_ib, k_gb, k_u, k_i = jax.random.split(key, 7)

    init_std = 0.1
    user_emb = (init_std * jax.random.normal(k_ue, (num_users, latent_factors))
                ).astype(jnp.float32)
    item_emb = (init_std * jax.random.normal(k_ie, (num_items, latent_factors))
                ).astype(jnp.float32)
    # _init_weights zero-inits the biases; use small random values here so the
    # bias path in the kernel is actually exercised numerically.
    user_bias = (0.05 * jax.random.normal(k_ub, (num_users, 1))).astype(jnp.float32)
    item_bias = (0.05 * jax.random.normal(k_ib, (num_items, 1))).astype(jnp.float32)
    global_bias = (0.1 * jax.random.normal(k_gb, (1,))).astype(jnp.float32)

    user_ids = jax.random.randint(k_u, (batch,), 0, num_users, dtype=jnp.int32)
    item_ids = jax.random.randint(k_i, (batch,), 0, num_items, dtype=jnp.int32)

    preds = bias_svd_forward(user_ids, item_ids, user_emb, item_emb,
                             user_bias, item_bias, global_bias)
    preds = jax.block_until_ready(preds)

    ref = bias_svd_reference(user_ids, item_ids, user_emb, item_emb,
                             user_bias, item_bias, global_bias)

    assert preds.shape == (batch,)
    assert jnp.allclose(preds, ref, atol=1e-5, rtol=1e-5)
    print("KERNEL_OK")
</pallas_src>

<mosaic_0001>
module attributes {stable_mosaic.version = 11 : i64} {
  func.func @_bias_svd_kernel(%arg0: i32, %arg1: memref<32x128xf32, #tpu.memory_space<vmem>>, %arg2: memref<32x128xf32, #tpu.memory_space<vmem>>, %arg3: memref<1x128xf32, #tpu.memory_space<vmem>>, %arg4: memref<1x128xf32, #tpu.memory_space<vmem>>) attributes {dimension_semantics = [#tpu.dimension_semantics<parallel>], iteration_bounds = array<i64: 1>, scalar_prefetch = 0 : i64, scratch_operands = 0 : i64, tpu.core_type = #tpu.core_type<tc>, window_params = [{transform_indices = @transform_0, window_bounds = array<i64: 32, 128>}, {transform_indices = @transform_1, window_bounds = array<i64: 32, 128>}, {transform_indices = @transform_2, window_bounds = array<i64: 1, 128>}, {transform_indices = @transform_3, window_bounds = array<i64: 1, 128>}]} {
    %c0 = arith.constant 0 : index
    %c0_0 = arith.constant 0 : index
    %0 = vector.load %arg1[%c0, %c0_0] : memref<32x128xf32, #tpu.memory_space<vmem>>, vector<32x128xf32>
    %c0_1 = arith.constant 0 : index
    %c0_2 = arith.constant 0 : index
    %1 = vector.load %arg2[%c0_1, %c0_2] : memref<32x128xf32, #tpu.memory_space<vmem>>, vector<32x128xf32>
    %2 = arith.mulf %0, %1 : vector<32x128xf32>
    %cst = arith.constant dense<0.000000e+00> : vector<128xf32>
    %3 = vector.multi_reduction <add>, %2, %cst [0] : vector<32x128xf32> to vector<128xf32>
    %4 = vector.shape_cast %3 : vector<128xf32> to vector<1x128xf32>
    %c0_3 = arith.constant 0 : index
    %c0_4 = arith.constant 0 : index
    %5 = vector.load %arg3[%c0_3, %c0_4] : memref<1x128xf32, #tpu.memory_space<vmem>>, vector<1x128xf32>
    %6 = arith.addf %4, %5 : vector<1x128xf32>
    %c0_5 = arith.constant 0 : index
    %c0_6 = arith.constant 0 : index
    %7 = vector.load %arg4[%c0_5, %c0_6] : memref<1x128xf32, #tpu.memory_space<vmem>>, vector<1x128xf32>
    tpu.vector_store %arg4[%c0_5, %c0_6], %6 {strides = array<i32>} : memref<1x128xf32, #tpu.memory_space<vmem>>, vector<1x128xf32>,
    return
  }
  func.func @transform_0(%arg0: i32) -> (i32, i32) {
    %c0_i32 = arith.constant 0 : i32
    %c0_i32_0 = arith.constant 0 : i32
    return %c0_i32, %arg0 : i32, i32
  }
  func.func @transform_1(%arg0: i32) -> (i32, i32) {
    %c0_i32 = arith.constant 0 : i32
    %c0_i32_0 = arith.constant 0 : i32
    return %c0_i32, %arg0 : i32, i32
  }
  func.func @transform_2(%arg0: i32) -> (i32, i32) {
    %c0_i32 = arith.constant 0 : i32
    %c0_i32_0 = arith.constant 0 : i32
    return %c0_i32, %arg0 : i32, i32
  }
  func.func @transform_3(%arg0: i32) -> (i32, i32) {
    %c0_i32 = arith.constant 0 : i32
    %c0_i32_0 = arith.constant 0 : i32
    return %c0_i32, %arg0 : i32, i32
  }
}

</mosaic_0001>

<llo_original>
// kernel: tpu_custom_call.1
$region0: #{tpu_custom_call.1}
  #allocation0 [shape = 'u32[]', space=smem, size = 0x4, offset = 0x4, fixed_abs, tag = 'smem constant byte address 0x4 - core index']
  #allocation1 [shape = 'u32[144,128]{1,0:T(1,128)}', space=vmem, size = 0x12000, scoped, tag = 'internal scratch']
  %s0 = inlined_call_operand.hbm [shape: f32[32,128], index: 0, kind: input, shape index: {}]
  %s1 = inlined_call_operand.hbm [shape: f32[32,128], index: 1, kind: input, shape index: {}]
  %s2 = inlined_call_operand.vmem [shape: f32[1,128], index: 2, kind: input, shape index: {}]
  %s3 = inlined_call_operand.hbm [shape: f32[1,128], index: 3, kind: output, shape index: {}]
  %s4 = sld [smem:[#allocation0]]
  $region30: #{tpu_custom_call.1} parent=0
    _
  %s6 = ssub.s32 1, %s4
  %s7 = scalar_select 0, %s6, %s4
  $region1: #{tpu_custom_call.1} parent=0
    #allocation2 [shape = 'u8[16384]{0}', space=vmem, size = 0x4000, scoped, tag = 'input window, operand 0, single buffered']
    #allocation3 [shape = 's32[1]{0}', space=sflag, size = 0x4, scoped, tag = 'scoped memory for tpu_custom_call.1']
    #allocation4 [shape = 's32[1]{0}', space=sflag, size = 0x4, scoped, tag = 'scoped memory for tpu_custom_call.1']
    #allocation5 [shape = 'u8[16384]{0}', space=vmem, size = 0x4000, scoped, tag = 'input window, operand 1, single buffered']
    #allocation6 [shape = 's32[1]{0}', space=sflag, size = 0x4, scoped, tag = 'scoped memory for tpu_custom_call.1']
    #allocation7 [shape = 'u8[512]{0}', space=vmem, size = 0x400, scoped, tag = 'output window, operand 0, single buffered']
    %8 = vsyncpa [#allocation3], 0
    %9 = vsyncpa [#allocation6], 0
    %10 = vsyncpa [#allocation4], 0
    // Predicated region
    $region2: #{tpu_custom_call.1} parent=1 // pred_check
      _
    $region3: #{tpu_custom_call.1} parent=1 // pred_check_branch
      %12 = sbr.rel (0) target = $region5
    $region4: #{tpu_custom_call.1} parent=1 // pred_region
      %s14 = ssub.s32 512, 512
      %15 = vsyncadd [#allocation3], %s14
      %s16 = sshll.u32 [#allocation2], 4
      %s17 = int_to_ptr.vmem [resolvable:$true] %s16
      %22 = dma.hbm_to_vmem [thread:$0]  %s0, 512, %s17, [#allocation3], 128, 128, 8
    $region5: #{tpu_custom_call.1} parent=1 // pred_fallthru
      _
    // Predicated region
    $region6: #{tpu_custom_call.1} parent=1 // pred_check
      _
    $region7: #{tpu_custom_call.1} parent=1 // pred_check_branch
      %24 = sbr.rel (0) target = $region9
    $region8: #{tpu_custom_call.1} parent=1 // pred_region
      %s26 = ssub.s32 512, 512
      %27 = vsyncadd [#allocation6], %s26
      %s28 = sshll.u32 [#allocation5], 4
      %s29 = int_to_ptr.vmem [resolvable:$true] %s28
      %34 = dma.hbm_to_vmem [thread:$0]  %s1, 512, %s29, [#allocation6], 128, 128, 8
    $region9: #{tpu_custom_call.1} parent=1 // pred_fallthru
      _
    // Predicated region
    $region10: #{tpu_custom_call.1} parent=1 // pred_check
      _
    $region11: #{tpu_custom_call.1} parent=1 // pred_check_branch
      %36 = sbr.rel (0) target = $region13
    $region12: #{tpu_custom_call.1} parent=1 // pred_region
      _
    $region13: #{tpu_custom_call.1} parent=1 // pred_fallthru
      _
    // Predicated region
    $region14: #{tpu_custom_call.1} parent=1 // pred_check
      _
    $region15: #{tpu_custom_call.1} parent=1 // pred_check_branch
      %38 = sbr.rel (0) target = $region17
    $region16: #{tpu_custom_call.1} parent=1 // pred_region
      %39 = dma.done [#allocation3], 512
    $region17: #{tpu_custom_call.1} parent=1 // pred_fallthru
      _
    // Predicated region
    $region18: #{tpu_custom_call.1} parent=1 // pred_check
      _
    $region19: #{tpu_custom_call.1} parent=1 // pred_check_branch
      %41 = sbr.rel (0) target = $region21
    $region20: #{tpu_custom_call.1} parent=1 // pred_region
      %42 = dma.done [#allocation6], 512
    $region21: #{tpu_custom_call.1} parent=1 // pred_fallthru
      _
    %v43 = vld [vmem:[#allocation2] sm:$0xff]
    %v44 = vld [vmem:[#allocation2 + $0x8] sm:$0xff]
    %v45 = vld [vmem:[#allocation2 + $0x10] sm:$0xff]
    %v46 = vld [vmem:[#allocation2 + $0x18] sm:$0xff]
    %v47 = vld [vmem:[#allocation5] sm:$0xff]
    %v48 = vld [vmem:[#allocation5 + $0x8] sm:$0xff]
    %v49 = vld [vmem:[#allocation5 + $0x10] sm:$0xff]
    %v50 = vld [vmem:[#allocation5 + $0x18] sm:$0xff]
    %v51 = vmul.f32 %v43, %v47
    %v52 = vmul.f32 %v44, %v48
    %v53 = vmul.f32 %v45, %v49
    %v54 = vmul.f32 %v46, %v50
    %v55 = vadd.f32 %v51, %v52
    %v56 = vadd.f32 %v55, %v53
    %v57 = vadd.f32 %v56, %v54
    %v58 = vrot.slane %v57, 4
    %v59 = vadd.f32 %v57, %v58
    %v60 = vrot.slane %v59, 2
    %v61 = vadd.f32 %v59, %v60
    %v62 = vrot.slane %v61, 1
    %v63 = vadd.f32 %v61, %v62
    %v64 = vld [vmem:[%s2] sm:$0x1]
    %v65 = vadd.f32 %v63, %v64
    %66 = vst [vmem:[#allocation7] sm:$0x1] %v65
    // Predicated region
    $region22: #{tpu_custom_call.1} parent=1 // pred_check
      _
    $region23: #{tpu_custom_call.1} parent=1 // pred_check_branch
      %68 = sbr.rel (0) target = $region25
    $region24: #{tpu_custom_call.1} parent=1 // pred_region
      %s70 = ssub.s32 16, 16
      %71 = vsyncadd [#allocation4], %s70
      %s73 = sshll.u32 [#allocation7], 4
      %s74 = int_to_ptr.vmem [resolvable:$true] %s73
      %76 = dma.vmem_to_hbm [thread:$0]  %s74, 16, %s3, [#allocation4]
    $region25: #{tpu_custom_call.1} parent=1 // pred_fallthru
      _
    // Predicated region
    $region26: #{tpu_custom_call.1} parent=1 // pred_check
      _
    $region27: #{tpu_custom_call.1} parent=1 // pred_check_branch
      %78 = sbr.rel (0) target = $region29
    $region28: #{tpu_custom_call.1} parent=1 // pred_region
      %79 = dma.done [#allocation4], 16
    $region29: #{tpu_custom_call.1} parent=1 // pred_fallthru
      _
    %80 = vsyncpa [#allocation3], 1
    %81 = vsyncpa [#allocation6], 1
    %82 = vsyncpa [#allocation4], 1

</llo_original>
